<compile_context>
chip_gen: v7x
topology: tpu7x:2x2x1
jax: 0.10.0
libtpu: 0.0.40
codegen_flags: <defaults>
</compile_context>

<pallas_src>
import functools
import math

import jax
import jax.numpy as jnp
from jax.experimental import pallas as pl
from jax.experimental.pallas import tpu as pltpu


# ----------------------------------------------------------------------------
# Tiled linear:  y = x @ W + b    (x: (M, K), W: (K, N), b: (1, N))
# ----------------------------------------------------------------------------

def _linear_kernel(x_ref, w_ref, b_ref, o_ref, acc_ref):
    k_step = pl.program_id(2)

    @pl.when(k_step == 0)
    def _():
        acc_ref[...] = jnp.zeros_like(acc_ref)

    # bf16 MXU operands, f32 accumulation.
    acc_ref[...] += jnp.dot(
        x_ref[...].astype(jnp.bfloat16),
        w_ref[...].astype(jnp.bfloat16),
        preferred_element_type=jnp.float32,
    )

    @pl.when(k_step == pl.num_programs(2) - 1)
    def _():
        o_ref[...] = (acc_ref[...] + b_ref[...]).astype(o_ref.dtype)


def _fit_tile(dim, target):
    """Largest power-of-two-ish tile <= target that divides `dim`; falls back to full dim."""
    if dim <= target:
        return dim
    t = target
    while t > 8 and dim % t:
        t //= 2
    return t if dim % t == 0 else dim


def linear(x, w, b, *, tm_target=256, tn_target=256, tk_target=512):
    M, K = x.shape
    K2, N = w.shape
    assert K == K2 and b.shape == (1, N)
    tm = _fit_tile(M, tm_target)
    tn = _fit_tile(N, tn_target)
    tk = _fit_tile(K, tk_target)

    return pl.pallas_call(
        _linear_kernel,
        out_shape=jax.ShapeDtypeStruct((M, N), x.dtype),
        grid_spec=pltpu.PrefetchScalarGridSpec(
            num_scalar_prefetch=0,
            grid=(M // tm, N // tn, K // tk),
            in_specs=[
                pl.BlockSpec((tm, tk), lambda i, j, k: (i, k)),   # x tile
                pl.BlockSpec((tk, tn), lambda i, j, k: (k, j)),   # weight tile
                pl.BlockSpec((1, tn), lambda i, j, k: (0, j)),    # bias tile
            ],
            out_specs=pl.BlockSpec((tm, tn), lambda i, j, k: (i, j)),
            scratch_shapes=[pltpu.VMEM((tm, tn), jnp.float32)],
        ),
        compiler_params=pltpu.CompilerParams(
            dimension_semantics=("parallel", "parallel", "arbitrary"),
            vmem_limit_bytes=32 * 1024 * 1024,
        ),
        cost_estimate=pl.CostEstimate(
            flops=2 * M * N * K,
            transcendentals=0,
            bytes_accessed=4 * (M * K + K * N + N + M * N),
        ),
    )(x, w, b)


# ----------------------------------------------------------------------------
# Flash attention (causal):  q, k, v : (B, H, T, D) -> (B, H, T, D)
# ----------------------------------------------------------------------------

def _flash_kernel(q_ref, k_ref, v_ref, o_ref, m_sc, l_sc, acc_sc,
                  *, scale, tq, tk):
    qi = pl.program_id(2)
    ki = pl.program_id(3)

    @pl.when(ki == 0)
    def _():
        m_sc[...] = jnp.full_like(m_sc, -jnp.inf)
        l_sc[...] = jnp.zeros_like(l_sc)
        acc_sc[...] = jnp.zeros_like(acc_sc)

    # Causal block skip: this kv block is needed iff its first key column is
    # <= the last query row of the current q tile.
    @pl.when(ki * tk <= qi * tq + (tq - 1))
    def _():
        # Fold 1/sqrt(D) into q (tq*D mults instead of tq*tk).
        q = (q_ref[...] * scale).astype(jnp.bfloat16)          # (tq, D)
        k = k_ref[...].astype(jnp.bfloat16)                    # (tk, D)

        # scores (tq, tk) = q @ k^T on the MXU, f32 accumulate.
        s = jax.lax.dot_general(
            q, k, (((1,), (1,)), ((), ())),
            preferred_element_type=jnp.float32)

        row = jax.lax.broadcasted_iota(jnp.int32, (tq, tk), 0) + qi * tq
        col = jax.lax.broadcasted_iota(jnp.int32, (tq, tk), 1) + ki * tk
        s = jnp.where(col <= row, s, -jnp.inf)

        # Online softmax update (f32 statistics). The ki==0 block always has
        # at least the first column unmasked for every row, so m stays finite
        # and exp(m_prev - m_new) never hits inf-inf.
        m_prev = m_sc[...]
        m_new = jnp.maximum(m_prev, jnp.max(s, axis=-1, keepdims=True))
        alpha = jnp.exp(m_prev - m_new)
        p = jnp.exp(s - m_new)

        l_sc[...] = alpha * l_sc[...] + jnp.sum(p, axis=-1, keepdims=True)
        acc_sc[...] = alpha * acc_sc[...] + jnp.dot(
            p.astype(jnp.bfloat16), v_ref[...].astype(jnp.bfloat16),
            preferred_element_type=jnp.float32)
        m_sc[...] = m_new

    @pl.when(ki == pl.num_programs(3) - 1)
    def _():
        inv_l = pl.reciprocal(l_sc[...], approx=True)          # EUP slot
        o_ref[...] = (acc_sc[...] * inv_l).astype(o_ref.dtype)


def flash_attention(q, k, v, *, tq_target=128, tk_target=128):
    B, H, T, D = q.shape
    tq = _fit_tile(T, tq_target)
    tk = _fit_tile(T, tk_target)
    scale = 1.0 / math.sqrt(D)

    kernel = functools.partial(_flash_kernel, scale=scale, tq=tq, tk=tk)

    return pl.pallas_call(
        kernel,
        out_shape=jax.ShapeDtypeStruct((B, H, T, D), q.dtype),
        grid_spec=pltpu.PrefetchScalarGridSpec(
            num_scalar_prefetch=0,
            grid=(B, H, T // tq, T // tk),          # kv reduction axis last
            in_specs=[
                pl.BlockSpec((None, None, tq, D), lambda b, h, i, j: (b, h, i, 0)),
                pl.BlockSpec((None, None, tk, D), lambda b, h, i, j: (b, h, j, 0)),
                pl.BlockSpec((None, None, tk, D), lambda b, h, i, j: (b, h, j, 0)),
            ],
            out_specs=pl.BlockSpec((None, None, tq, D),
                                   lambda b, h, i, j: (b, h, i, 0)),
            scratch_shapes=[
                pltpu.VMEM((tq, 1), jnp.float32),   # running max m
                pltpu.VMEM((tq, 1), jnp.float32),   # running denom l
                pltpu.VMEM((tq, D), jnp.float32),   # output accumulator
            ],
        ),
        compiler_params=pltpu.CompilerParams(
            dimension_semantics=("parallel", "parallel", "parallel", "arbitrary"),
            vmem_limit_bytes=32 * 1024 * 1024,
        ),
        cost_estimate=pl.CostEstimate(
            flops=4 * B * H * T * T * D,
            transcendentals=B * H * T * T,
            bytes_accessed=4 * 4 * B * H * T * D,
        ),
    )(q, k, v)


# ----------------------------------------------------------------------------
# Full module forward
# ----------------------------------------------------------------------------

def causal_self_attention(x, params, n_head):
    """x: (B, T, C). params: dict of (C, C) weights / (1, C) biases. Returns (B, T, C)."""
    B, T, C = x.shape
    assert C % n_head == 0
    D = C // n_head

    # Fused QKV projection: one tiled matmul against a concatenated (C, 3C) weight.
    w_qkv = jnp.concatenate([params['wq'], params['wk'], params['wv']], axis=1)
    b_qkv = jnp.concatenate([params['bq'], params['bk'], params['bv']], axis=1)
    qkv = linear(x.reshape(B * T, C), w_qkv, b_qkv)             # (B*T, 3C)
    q, k, v = jnp.split(qkv, 3, axis=1)

    def to_heads(t):  # (B*T, C) -> (B, H, T, D), D lane-contiguous (wrapper-side layout)
        return t.reshape(B, T, n_head, D).transpose(0, 2, 1, 3)

    y = flash_attention(to_heads(q), to_heads(k), to_heads(v))  # (B, H, T, D)
    y = y.transpose(0, 2, 1, 3).reshape(B * T, C)

    # Output projection. attn_drop / resid_drop are identity in eval mode.
    out = linear(y, params['wp'], params['bp'])                 # (B*T, C)
    return out.reshape(B, T, C)


# ----------------------------------------------------------------------------
# Plain-JAX reference matching the PyTorch forward (dropout = identity)
# ----------------------------------------------------------------------------

def _reference(x, params, n_head):
    B, T, C = x.shape
    D = C // n_head

    def lin(t, w, b):
        return jnp.einsum('btc,cd->btd', t, w) + b

    q = lin(x, params['wq'], params['bq'][0]).reshape(B, T, n_head, D).transpose(0, 2, 1, 3)
    k = lin(x, params['wk'], params['bk'][0]).reshape(B, T, n_head, D).transpose(0, 2, 1, 3)
    v = lin(x, params['wv'], params['bv'][0]).reshape(B, T, n_head, D).transpose(0, 2, 1, 3)
    att = jnp.einsum('bhtd,bhsd->bhts', q, k) / math.sqrt(D)
    mask = jnp.tril(jnp.ones((T, T), bool))
    att = jnp.where(mask[None, None], att, -jnp.inf)
    att = jax.nn.softmax(att, axis=-1)
    y = jnp.einsum('bhts,bhsd->bhtd', att, v).transpose(0, 2, 1, 3).reshape(B, T, C)
    return lin(y, params['wp'], params['bp'][0])


if __name__ == "__main__":
    # Small config consistent with the module: embedding_dim=32, block_size=8, n_head=4.
    B, T, C, n_head = 2, 8, 32, 4

    key = jax.random.PRNGKey(0)
    ks = jax.random.split(key, 9)
    s = 0.02
    params = {
        'wq': s * jax.random.normal(ks[0], (C, C), jnp.float32),
        'wk': s * jax.random.normal(ks[1], (C, C), jnp.float32),
        'wv': s * jax.random.normal(ks[2], (C, C), jnp.float32),
        'wp': s * jax.random.normal(ks[3], (C, C), jnp.float32),
        'bq': s * jax.random.normal(ks[4], (1, C), jnp.float32),
        'bk': s * jax.random.normal(ks[5], (1, C), jnp.float32),
        'bv': s * jax.random.normal(ks[6], (1, C), jnp.float32),
        'bp': s * jax.random.normal(ks[7], (1, C), jnp.float32),
    }
    x = jax.random.normal(ks[8], (B, T, C), jnp.float32)

    fwd = jax.jit(functools.partial(causal_self_attention, n_head=n_head))
    out = jax.block_until_ready(fwd(x, params))

    ref = _reference(x, params, n_head)
    assert out.shape == (B, T, C)
    # bf16 MXU operands + approx reciprocal -> relaxed tolerance vs the f32 reference.
    max_err = float(jnp.max(jnp.abs(out - ref)))
    assert jnp.allclose(out, ref, atol=2e-2, rtol=2e-2), f"mismatch vs reference: {max_err}"

    print("KERNEL_OK")
</pallas_src>

<mosaic_0001>
module attributes {stable_mosaic.version = 11 : i64} {
  func.func @_linear_kernel(%arg0: i32, %arg1: i32, %arg2: i32, %arg3: memref<16x32xf32, #tpu.memory_space<vmem>>, %arg4: memref<32x96xf32, #tpu.memory_space<vmem>>, %arg5: memref<1x96xf32, #tpu.memory_space<vmem>>, %arg6: memref<16x96xf32, #tpu.memory_space<vmem>>, %arg7: memref<16x96xf32, #tpu.memory_space<vmem>>) attributes {dimension_semantics = [#tpu.dimension_semantics<parallel>, #tpu.dimension_semantics<parallel>, #tpu.dimension_semantics<arbitrary>], iteration_bounds = array<i64: 1, 1, 1>, scalar_prefetch = 0 : i64, scratch_operands = 1 : i64, tpu.core_type = #tpu.core_type<tc>, window_params = [{transform_indices = @transform_0, window_bounds = array<i64: 16, 32>}, {transform_indices = @transform_1, window_bounds = array<i64: 32, 96>}, {transform_indices = @transform_2, window_bounds = array<i64: 1, 96>}, {transform_indices = @transform_3, window_bounds = array<i64: 16, 96>}]} {
    %c0_i32 = arith.constant 0 : i32
    %0 = arith.cmpi eq, %arg2, %c0_i32 : i32
    %1 = arith.extui %0 : i1 to i32
    %c0_i32_0 = arith.constant 0 : i32
    %2 = arith.cmpi ne, %1, %c0_i32_0 : i32
    scf.if %2 {
      %cst_10 = arith.constant 0.000000e+00 : f32
      %14 = vector.broadcast %cst_10 : f32 to vector<16x96xf32>
      %c0_11 = arith.constant 0 : index
      %c0_12 = arith.constant 0 : index
      %15 = vector.load %arg7[%c0_11, %c0_12] : memref<16x96xf32, #tpu.memory_space<vmem>>, vector<16x96xf32>
      tpu.vector_store %arg7[%c0_11, %c0_12], %14 {strides = array<i32>} : memref<16x96xf32, #tpu.memory_space<vmem>>, vector<16x96xf32>,
    } else {
    }
    %c0 = arith.constant 0 : index
    %c0_1 = arith.constant 0 : index
    %3 = vector.load %arg7[%c0, %c0_1] : memref<16x96xf32, #tpu.memory_space<vmem>>, vector<16x96xf32>
    %c0_2 = arith.constant 0 : index
    %c0_3 = arith.constant 0 : index
    %4 = vector.load %arg3[%c0_2, %c0_3] : memref<16x32xf32, #tpu.memory_space<vmem>>, vector<16x32xf32>
    %5 = arith.truncf %4 : vector<16x32xf32> to vector<16x32xbf16>
    %c0_4 = arith.constant 0 : index
    %c0_5 = arith.constant 0 : index
    %6 = vector.load %arg4[%c0_4, %c0_5] : memref<32x96xf32, #tpu.memory_space<vmem>>, vector<32x96xf32>
    %7 = arith.truncf %6 : vector<32x96xf32> to vector<32x96xbf16>
    %cst = arith.constant dense<0.000000e+00> : vector<16x96xf32>
    %8 = tpu.matmul %5, %7, %cst {dimension_numbers = #tpu.dot_dimension_numbers<[1], [0], [0], [1], [0, 0, 1, 1], [], []>} : vector<16x32xbf16>, vector<32x96xbf16>, vector<16x96xf32> -> vector<16x96xf32>
    %9 = arith.addf %3, %8 : vector<16x96xf32>
    %c0_6 = arith.constant 0 : index
    %c0_7 = arith.constant 0 : index
    %10 = vector.load %arg7[%c0_6, %c0_7] : memref<16x96xf32, #tpu.memory_space<vmem>>, vector<16x96xf32>
    tpu.vector_store %arg7[%c0_6, %c0_7], %9 {strides = array<i32>} : memref<16x96xf32, #tpu.memory_space<vmem>>, vector<16x96xf32>,
    %c0_i32_8 = arith.constant 0 : i32
    %11 = arith.cmpi eq, %arg2, %c0_i32_8 : i32
    %12 = arith.extui %11 : i1 to i32
    %c0_i32_9 = arith.constant 0 : i32
    %13 = arith.cmpi ne, %12, %c0_i32_9 : i32
    scf.if %13 {
      %c0_10 = arith.constant 0 : index
      %c0_11 = arith.constant 0 : index
      %14 = vector.load %arg7[%c0_10, %c0_11] : memref<16x96xf32, #tpu.memory_space<vmem>>, vector<16x96xf32>
      %c0_12 = arith.constant 0 : index
      %c0_13 = arith.constant 0 : index
      %15 = vector.load %arg5[%c0_12, %c0_13] : memref<1x96xf32, #tpu.memory_space<vmem>>, vector<1x96xf32>
      %16 = vector.broadcast %15 : vector<1x96xf32> to vector<16x96xf32>
      %17 = arith.addf %14, %16 : vector<16x96xf32>
      %c0_14 = arith.constant 0 : index
      %c0_15 = arith.constant 0 : index
      %18 = vector.load %arg6[%c0_14, %c0_15] : memref<16x96xf32, #tpu.memory_space<vmem>>, vector<16x96xf32>
      tpu.vector_store %arg6[%c0_14, %c0_15], %17 {strides = array<i32>} : memref<16x96xf32, #tpu.memory_space<vmem>>, vector<16x96xf32>,
    } else {
    }
    return
  }
  func.func @transform_0(%arg0: i32, %arg1: i32, %arg2: i32) -> (i32, i32) {
    %c0_i32 = arith.constant 0 : i32
    return %arg0, %arg2 : i32, i32
  }
  func.func @transform_1(%arg0: i32, %arg1: i32, %arg2: i32) -> (i32, i32) {
    %c0_i32 = arith.constant 0 : i32
    return %arg2, %arg1 : i32, i32
  }
  func.func @transform_2(%arg0: i32, %arg1: i32, %arg2: i32) -> (i32, i32) {
    %c0_i32 = arith.constant 0 : i32
    %c0_i32_0 = arith.constant 0 : i32
    return %c0_i32, %arg1 : i32, i32
  }
  func.func @transform_3(%arg0: i32, %arg1: i32, %arg2: i32) -> (i32, i32) {
    %c0_i32 = arith.constant 0 : i32
    return %arg0, %arg1 : i32, i32
  }
}

module attributes {stable_mosaic.version = 11 : i64} {
  func.func @_flash_kernel(%arg0: i32, %arg1: i32, %arg2: i32, %arg3: i32, %arg4: memref<1x1x8x8xf32, #tpu.memory_space<vmem>>, %arg5: memref<1x1x8x8xf32, #tpu.memory_space<vmem>>, %arg6: memref<1x1x8x8xf32, #tpu.memory_space<vmem>>, %arg7: memref<1x1x8x8xf32, #tpu.memory_space<vmem>>, %arg8: memref<8x1xf32, #tpu.memory_space<vmem>>, %arg9: memref<8x1xf32, #tpu.memory_space<vmem>>, %arg10: memref<8x8xf32, #tpu.memory_space<vmem>>) attributes {dimension_semantics = [#tpu.dimension_semantics<parallel>, #tpu.dimension_semantics<parallel>, #tpu.dimension_semantics<parallel>, #tpu.dimension_semantics<arbitrary>], iteration_bounds = array<i64: 2, 4, 1, 1>, scalar_prefetch = 0 : i64, scratch_operands = 3 : i64, tpu.core_type = #tpu.core_type<tc>, window_params = [{transform_indices = @transform_0, window_bounds = array<i64: 1, 1, 8, 8>}, {transform_indices = @transform_1, window_bounds = array<i64: 1, 1, 8, 8>}, {transform_indices = @transform_2, window_bounds = array<i64: 1, 1, 8, 8>}, {transform_indices = @transform_3, window_bounds = array<i64: 1, 1, 8, 8>}]} {
    %c0_i32 = arith.constant 0 : i32
    %0 = arith.cmpi eq, %arg3, %c0_i32 : i32
    %1 = arith.extui %0 : i1 to i32
    %c0_i32_0 = arith.constant 0 : i32
    %2 = arith.cmpi ne, %1, %c0_i32_0 : i32
    scf.if %2 {
      %cst = arith.constant 0xFF800000 : f32
      %12 = vector.broadcast %cst : f32 to vector<8x1xf32>
      %c0 = arith.constant 0 : index
      %c0_5 = arith.constant 0 : index
      %13 = vector.load %arg8[%c0, %c0_5] : memref<8x1xf32, #tpu.memory_space<vmem>>, vector<8x1xf32>
      tpu.vector_store %arg8[%c0, %c0_5], %12 {strides = array<i32>} : memref<8x1xf32, #tpu.memory_space<vmem>>, vector<8x1xf32>,
      %cst_6 = arith.constant 0.000000e+00 : f32
      %14 = vector.broadcast %cst_6 : f32 to vector<8x1xf32>
      %c0_7 = arith.constant 0 : index
      %c0_8 = arith.constant 0 : index
      %15 = vector.load %arg9[%c0_7, %c0_8] : memref<8x1xf32, #tpu.memory_space<vmem>>, vector<8x1xf32>
      tpu.vector_store %arg9[%c0_7, %c0_8], %14 {strides = array<i32>} : memref<8x1xf32, #tpu.memory_space<vmem>>, vector<8x1xf32>,
      %cst_9 = arith.constant 0.000000e+00 : f32
      %16 = vector.broadcast %cst_9 : f32 to vector<8x8xf32>
      %c0_10 = arith.constant 0 : index
      %c0_11 = arith.constant 0 : index
      %17 = vector.load %arg10[%c0_10, %c0_11] : memref<8x8xf32, #tpu.memory_space<vmem>>, vector<8x8xf32>
      tpu.vector_store %arg10[%c0_10, %c0_11], %16 {strides = array<i32>} : memref<8x8xf32, #tpu.memory_space<vmem>>, vector<8x8xf32>,
    } else {
    }
    %c8_i32 = arith.constant 8 : i32
    %3 = arith.muli %arg3, %c8_i32 : i32
    %c8_i32_1 = arith.constant 8 : i32
    %4 = arith.muli %arg2, %c8_i32_1 : i32
    %c7_i32 = arith.constant 7 : i32
    %5 = arith.addi %4, %c7_i32 : i32
    %6 = arith.cmpi sle, %3, %5 : i32
    %7 = arith.extui %6 : i1 to i32
    %c0_i32_2 = arith.constant 0 : i32
    %8 = arith.cmpi ne, %7, %c0_i32_2 : i32
    scf.if %8 {
      %c0 = arith.constant 0 : index
      %c0_5 = arith.constant 0 : index
      %c0_6 = arith.constant 0 : index
      %c0_7 = arith.constant 0 : index
      %12 = vector.load %arg4[%c0, %c0_5, %c0_6, %c0_7] : memref<1x1x8x8xf32, #tpu.memory_space<vmem>>, vector<1x1x8x8xf32>
      %13 = vector.shape_cast %12 : vector<1x1x8x8xf32> to vector<8x8xf32>
      %cst = arith.constant 0.353553385 : f32
      %14 = vector.broadcast %cst : f32 to vector<8x8xf32>
      %15 = arith.mulf %13, %14 : vector<8x8xf32>
      %16 = arith.truncf %15 : vector<8x8xf32> to vector<8x8xbf16>
      %c0_8 = arith.constant 0 : index
      %c0_9 = arith.constant 0 : index
      %c0_10 = arith.constant 0 : index
      %c0_11 = arith.constant 0 : index
      %17 = vector.load %arg5[%c0_8, %c0_9, %c0_10, %c0_11] : memref<1x1x8x8xf32, #tpu.memory_space<vmem>>, vector<1x1x8x8xf32>
      %18 = vector.shape_cast %17 : vector<1x1x8x8xf32> to vector<8x8xf32>
      %19 = arith.truncf %18 : vector<8x8xf32> to vector<8x8xbf16>
      %cst_12 = arith.constant dense<0.000000e+00> : vector<8x8xf32>
      %20 = tpu.matmul %16, %19, %cst_12 {dimension_numbers = #tpu.dot_dimension_numbers<[1], [1], [0], [0], [0, 0, 1, 0], [], []>} : vector<8x8xbf16>, vector<8x8xbf16>, vector<8x8xf32> -> vector<8x8xf32>
      %21 = tpu.iota {dimensions = array<i32: 0>} : vector<8x8xi32>
      %c8_i32_13 = arith.constant 8 : i32
      %22 = arith.muli %arg2, %c8_i32_13 : i32
      %23 = vector.broadcast %22 : i32 to vector<8x8xi32>
      %24 = arith.addi %21, %23 : vector<8x8xi32>
      %25 = tpu.iota {dimensions = array<i32: 1>} : vector<8x8xi32>
      %c8_i32_14 = arith.constant 8 : i32
      %26 = arith.muli %arg3, %c8_i32_14 : i32
      %27 = vector.broadcast %26 : i32 to vector<8x8xi32>
      %28 = arith.addi %25, %27 : vector<8x8xi32>
      %29 = arith.cmpi sle, %28, %24 : vector<8x8xi32>
      %cst_15 = arith.constant 0xFF800000 : f32
      %30 = vector.broadcast %cst_15 : f32 to vector<8x8xf32>
      %31 = arith.select %29, %20, %30 : vector<8x8xi1>, vector<8x8xf32>
      %c0_16 = arith.constant 0 : index
      %c0_17 = arith.constant 0 : index
      %32 = vector.load %arg8[%c0_16, %c0_17] : memref<8x1xf32, #tpu.memory_space<vmem>>, vector<8x1xf32>
      %cst_18 = arith.constant dense<0xFF800000> : vector<8xf32>
      %33 = vector.multi_reduction <maximumf>, %31, %cst_18 [1] : vector<8x8xf32> to vector<8xf32>
      %34 = vector.shape_cast %33 : vector<8xf32> to vector<8x1xf32>
      %35 = arith.maximumf %32, %34 : vector<8x1xf32>
      %36 = arith.subf %32, %35 : vector<8x1xf32>
      %37 = math.exp %36 : vector<8x1xf32>
      %38 = vector.broadcast %35 : vector<8x1xf32> to vector<8x8xf32>
      %39 = arith.subf %31, %38 : vector<8x8xf32>
      %40 = math.exp %39 : vector<8x8xf32>
      %c0_19 = arith.constant 0 : index
      %c0_20 = arith.constant 0 : index
      %41 = vector.load %arg9[%c0_19, %c0_20] : memref<8x1xf32, #tpu.memory_space<vmem>>, vector<8x1xf32>
      %42 = arith.mulf %37, %41 : vector<8x1xf32>
      %cst_21 = arith.constant dense<0.000000e+00> : vector<8xf32>
      %43 = vector.multi_reduction <add>, %40, %cst_21 [1] : vector<8x8xf32> to vector<8xf32>
      %44 = vector.shape_cast %43 : vector<8xf32> to vector<8x1xf32>
      %45 = arith.addf %42, %44 : vector<8x1xf32>
      %c0_22 = arith.constant 0 : index
      %c0_23 = arith.constant 0 : index
      %46 = vector.load %arg9[%c0_22, %c0_23] : memref<8x1xf32, #tpu.memory_space<vmem>>, vector<8x1xf32>
      tpu.vector_store %arg9[%c0_22, %c0_23], %45 {strides = array<i32>} : memref<8x1xf32, #tpu.memory_space<vmem>>, vector<8x1xf32>,
      %c0_24 = arith.constant 0 : index
      %c0_25 = arith.constant 0 : index
      %47 = vector.load %arg10[%c0_24, %c0_25] : memref<8x8xf32, #tpu.memory_space<vmem>>, vector<8x8xf32>
      %48 = vector.broadcast %37 : vector<8x1xf32> to vector<8x8xf32>
      %49 = arith.mulf %48, %47 : vector<8x8xf32>
      %50 = arith.truncf %40 : vector<8x8xf32> to vector<8x8xbf16>
      %c0_26 = arith.constant 0 : index
      %c0_27 = arith.constant 0 : index
      %c0_28 = arith.constant 0 : index
      %c0_29 = arith.constant 0 : index
      %51 = vector.load %arg6[%c0_26, %c0_27, %c0_28, %c0_29] : memref<1x1x8x8xf32, #tpu.memory_space<vmem>>, vector<1x1x8x8xf32>
      %52 = vector.shape_cast %51 : vector<1x1x8x8xf32> to vector<8x8xf32>
      %53 = arith.truncf %52 : vector<8x8xf32> to vector<8x8xbf16>
      %cst_30 = arith.constant dense<0.000000e+00> : vector<8x8xf32>
      %54 = tpu.matmul %50, %53, %cst_30 {dimension_numbers = #tpu.dot_dimension_numbers<[1], [0], [0], [1], [0, 0, 1, 1], [], []>} : vector<8x8xbf16>, vector<8x8xbf16>, vector<8x8xf32> -> vector<8x8xf32>
      %55 = arith.addf %49, %54 : vector<8x8xf32>
      %c0_31 = arith.constant 0 : index
      %c0_32 = arith.constant 0 : index
      %56 = vector.load %arg10[%c0_31, %c0_32] : memref<8x8xf32, #tpu.memory_space<vmem>>, vector<8x8xf32>
      tpu.vector_store %arg10[%c0_31, %c0_32], %55 {strides = array<i32>} : memref<8x8xf32, #tpu.memory_space<vmem>>, vector<8x8xf32>,
      %c0_33 = arith.constant 0 : index
      %c0_34 = arith.constant 0 : index
      %57 = vector.load %arg8[%c0_33, %c0_34] : memref<8x1xf32, #tpu.memory_space<vmem>>, vector<8x1xf32>
      tpu.vector_store %arg8[%c0_33, %c0_34], %35 {strides = array<i32>} : memref<8x1xf32, #tpu.memory_space<vmem>>, vector<8x1xf32>,
    } else {
    }
    %c0_i32_3 = arith.constant 0 : i32
    %9 = arith.cmpi eq, %arg3, %c0_i32_3 : i32
    %10 = arith.extui %9 : i1 to i32
    %c0_i32_4 = arith.constant 0 : i32
    %11 = arith.cmpi ne, %10, %c0_i32_4 : i32
    scf.if %11 {
      %c0 = arith.constant 0 : index
      %c0_5 = arith.constant 0 : index
      %12 = vector.load %arg9[%c0, %c0_5] : memref<8x1xf32, #tpu.memory_space<vmem>>, vector<8x1xf32>
      %13 = tpu.reciprocal %12 {approx = true} : vector<8x1xf32> -> vector<8x1xf32>
      %c0_6 = arith.constant 0 : index
      %c0_7 = arith.constant 0 : index
      %14 = vector.load %arg10[%c0_6, %c0_7] : memref<8x8xf32, #tpu.memory_space<vmem>>, vector<8x8xf32>
      %15 = vector.broadcast %13 : vector<8x1xf32> to vector<8x8xf32>
      %16 = arith.mulf %14, %15 : vector<8x8xf32>
      %c0_8 = arith.constant 0 : index
      %c0_9 = arith.constant 0 : index
      %c0_10 = arith.constant 0 : index
      %c0_11 = arith.constant 0 : index
      %17 = vector.load %arg7[%c0_8, %c0_9, %c0_10, %c0_11] : memref<1x1x8x8xf32, #tpu.memory_space<vmem>>, vector<1x1x8x8xf32>
      %18 = vector.shape_cast %17 : vector<1x1x8x8xf32> to vector<8x8xf32>
      %19 = vector.shape_cast %16 : vector<8x8xf32> to vector<1x1x8x8xf32>
      tpu.vector_store %arg7[%c0_8, %c0_9, %c0_10, %c0_11], %19 {strides = array<i32>} : memref<1x1x8x8xf32, #tpu.memory_space<vmem>>, vector<1x1x8x8xf32>,
    } else {
    }
    return
  }
  func.func @transform_0(%arg0: i32, %arg1: i32, %arg2: i32, %arg3: i32) -> (i32, i32, i32, i32) {
    %c0_i32 = arith.constant 0 : i32
    %c0_i32_0 = arith.constant 0 : i32
    return %arg0, %arg1, %arg2, %c0_i32 : i32, i32, i32, i32
  }
  func.func @transform_1(%arg0: i32, %arg1: i32, %arg2: i32, %arg3: i32) -> (i32, i32, i32, i32) {
    %c0_i32 = arith.constant 0 : i32
    %c0_i32_0 = arith.constant 0 : i32
    return %arg0, %arg1, %arg3, %c0_i32 : i32, i32, i32, i32
  }
  func.func @transform_2(%arg0: i32, %arg1: i32, %arg2: i32, %arg3: i32) -> (i32, i32, i32, i32) {
    %c0_i32 = arith.constant 0 : i32
    %c0_i32_0 = arith.constant 0 : i32
    return %arg0, %arg1, %arg3, %c0_i32 : i32, i32, i32, i32
  }
  func.func @transform_3(%arg0: i32, %arg1: i32, %arg2: i32, %arg3: i32) -> (i32, i32, i32, i32) {
    %c0_i32 = arith.constant 0 : i32
    %c0_i32_0 = arith.constant 0 : i32
    return %arg0, %arg1, %arg2, %c0_i32 : i32, i32, i32, i32
  }
}

module attributes {stable_mosaic.version = 11 : i64} {
  func.func @_linear_kernel(%arg0: i32, %arg1: i32, %arg2: i32, %arg3: memref<16x32xf32, #tpu.memory_space<vmem>>, %arg4: memref<32x32xf32, #tpu.memory_space<vmem>>, %arg5: memref<1x32xf32, #tpu.memory_space<vmem>>, %arg6: memref<16x32xf32, #tpu.memory_space<vmem>>, %arg7: memref<16x32xf32, #tpu.memory_space<vmem>>) attributes {dimension_semantics = [#tpu.dimension_semantics<parallel>, #tpu.dimension_semantics<parallel>, #tpu.dimension_semantics<arbitrary>], iteration_bounds = array<i64: 1, 1, 1>, scalar_prefetch = 0 : i64, scratch_operands = 1 : i64, tpu.core_type = #tpu.core_type<tc>, window_params = [{transform_indices = @transform_0, window_bounds = array<i64: 16, 32>}, {transform_indices = @transform_1, window_bounds = array<i64: 32, 32>}, {transform_indices = @transform_2, window_bounds = array<i64: 1, 32>}, {transform_indices = @transform_3, window_bounds = array<i64: 16, 32>}]} {
    %c0_i32 = arith.constant 0 : i32
    %0 = arith.cmpi eq, %arg2, %c0_i32 : i32
    %1 = arith.extui %0 : i1 to i32
    %c0_i32_0 = arith.constant 0 : i32
    %2 = arith.cmpi ne, %1, %c0_i32_0 : i32
    scf.if %2 {
      %cst_10 = arith.constant 0.000000e+00 : f32
      %14 = vector.broadcast %cst_10 : f32 to vector<16x32xf32>
      %c0_11 = arith.constant 0 : index
      %c0_12 = arith.constant 0 : index
      %15 = vector.load %arg7[%c0_11, %c0_12] : memref<16x32xf32, #tpu.memory_space<vmem>>, vector<16x32xf32>
      tpu.vector_store %arg7[%c0_11, %c0_12], %14 {strides = array<i32>} : memref<16x32xf32, #tpu.memory_space<vmem>>, vector<16x32xf32>,
    } else {
    }
    %c0 = arith.constant 0 : index
    %c0_1 = arith.constant 0 : index
    %3 = vector.load %arg7[%c0, %c0_1] : memref<16x32xf32, #tpu.memory_space<vmem>>, vector<16x32xf32>
    %c0_2 = arith.constant 0 : index
    %c0_3 = arith.constant 0 : index
    %4 = vector.load %arg3[%c0_2, %c0_3] : memref<16x32xf32, #tpu.memory_space<vmem>>, vector<16x32xf32>
    %5 = arith.truncf %4 : vector<16x32xf32> to vector<16x32xbf16>
    %c0_4 = arith.constant 0 : index
    %c0_5 = arith.constant 0 : index
    %6 = vector.load %arg4[%c0_4, %c0_5] : memref<32x32xf32, #tpu.memory_space<vmem>>, vector<32x32xf32>
    %7 = arith.truncf %6 : vector<32x32xf32> to vector<32x32xbf16>
    %cst = arith.constant dense<0.000000e+00> : vector<16x32xf32>
    %8 = tpu.matmul %5, %7, %cst {dimension_numbers = #tpu.dot_dimension_numbers<[1], [0], [0], [1], [0, 0, 1, 1], [], []>} : vector<16x32xbf16>, vector<32x32xbf16>, vector<16x32xf32> -> vector<16x32xf32>
    %9 = arith.addf %3, %8 : vector<16x32xf32>
    %c0_6 = arith.constant 0 : index
    %c0_7 = arith.constant 0 : index
    %10 = vector.load %arg7[%c0_6, %c0_7] : memref<16x32xf32, #tpu.memory_space<vmem>>, vector<16x32xf32>
    tpu.vector_store %arg7[%c0_6, %c0_7], %9 {strides = array<i32>} : memref<16x32xf32, #tpu.memory_space<vmem>>, vector<16x32xf32>,
    %c0_i32_8 = arith.constant 0 : i32
    %11 = arith.cmpi eq, %arg2, %c0_i32_8 : i32
    %12 = arith.extui %11 : i1 to i32
    %c0_i32_9 = arith.constant 0 : i32
    %13 = arith.cmpi ne, %12, %c0_i32_9 : i32
    scf.if %13 {
      %c0_10 = arith.constant 0 : index
      %c0_11 = arith.constant 0 : index
      %14 = vector.load %arg7[%c0_10, %c0_11] : memref<16x32xf32, #tpu.memory_space<vmem>>, vector<16x32xf32>
      %c0_12 = arith.constant 0 : index
      %c0_13 = arith.constant 0 : index
      %15 = vector.load %arg5[%c0_12, %c0_13] : memref<1x32xf32, #tpu.memory_space<vmem>>, vector<1x32xf32>
      %16 = vector.broadcast %15 : vector<1x32xf32> to vector<16x32xf32>
      %17 = arith.addf %14, %16 : vector<16x32xf32>
      %c0_14 = arith.constant 0 : index
      %c0_15 = arith.constant 0 : index
      %18 = vector.load %arg6[%c0_14, %c0_15] : memref<16x32xf32, #tpu.memory_space<vmem>>, vector<16x32xf32>
      tpu.vector_store %arg6[%c0_14, %c0_15], %17 {strides = array<i32>} : memref<16x32xf32, #tpu.memory_space<vmem>>, vector<16x32xf32>,
    } else {
    }
    return
  }
  func.func @transform_0(%arg0: i32, %arg1: i32, %arg2: i32) -> (i32, i32) {
    %c0_i32 = arith.constant 0 : i32
    return %arg0, %arg2 : i32, i32
  }
  func.func @transform_1(%arg0: i32, %arg1: i32, %arg2: i32) -> (i32, i32) {
    %c0_i32 = arith.constant 0 : i32
    return %arg2, %arg1 : i32, i32
  }
  func.func @transform_2(%arg0: i32, %arg1: i32, %arg2: i32) -> (i32, i32) {
    %c0_i32 = arith.constant 0 : i32
    %c0_i32_0 = arith.constant 0 : i32
    return %c0_i32, %arg1 : i32, i32
  }
  func.func @transform_3(%arg0: i32, %arg1: i32, %arg2: i32) -> (i32, i32) {
    %c0_i32 = arith.constant 0 : i32
    return %arg0, %arg1 : i32, i32
  }
}

</mosaic_0001>

<llo_original>
// kernel: causal_self_attention.3
$region0: #{causal_self_attention.3}
  #allocation0 [shape = 'u32[]', space=smem, size = 0x4, offset = 0x4, fixed_abs, tag = 'smem constant byte address 0x4 - core index']
  #allocation1 [shape = 'u32[144,128]{1,0:T(1,128)}', space=vmem, size = 0x12000, scoped, tag = 'internal scratch']
  #allocation2 [shape = 'f32[16,96]{1,0:T(8,128)}', space=vmem, size = 0x2000, scoped, tag = 'scratch operand']
  %s0 = inlined_call_operand.vmem [shape: f32[16,32], index: 0, kind: input, shape index: {}]
  %s1 = inlined_call_operand.vmem [shape: f32[32,96], index: 1, kind: input, shape index: {}]
  %s2 = inlined_call_operand.vmem [shape: f32[1,96], index: 2, kind: input, shape index: {}]
  %s3 = inlined_call_operand.vmem [shape: f32[16,96], index: 3, kind: output, shape index: {}]
  %s4 = sld [smem:[#allocation0]]
  $region30: #{causal_self_attention.3} parent=0
    _
  %s6 = ssub.s32 1, %s4
  %s7 = scalar_select 0, %s6, %s4
  // Predicated region
  $region2: #{causal_self_attention.3} parent=0 // pred_check
    _
  $region3: #{causal_self_attention.3} parent=0 // pred_check_branch
    %9 = sbr.rel (0) target = $region5
  $region4: #{causal_self_attention.3} parent=0 // pred_region
    _
  $region5: #{causal_self_attention.3} parent=0 // pred_fallthru
    _
  // Predicated region
  $region6: #{causal_self_attention.3} parent=0 // pred_check
    _
  $region7: #{causal_self_attention.3} parent=0 // pred_check_branch
    %11 = sbr.rel (0) target = $region9
  $region8: #{causal_self_attention.3} parent=0 // pred_region
    _
  $region9: #{causal_self_attention.3} parent=0 // pred_fallthru
    _
  // Predicated region
  $region10: #{causal_self_attention.3} parent=0 // pred_check
    _
  $region11: #{causal_self_attention.3} parent=0 // pred_check_branch
    %13 = sbr.rel (0) target = $region13
  $region12: #{causal_self_attention.3} parent=0 // pred_region
    _
  $region13: #{causal_self_attention.3} parent=0 // pred_fallthru
    _
  %p15 = scmp.eq.s32.totalorder 0, 0
  // Predicated region
  $region14: #{causal_self_attention.3} parent=0 // pred_check
    %p16 = pneg %p15
  $region15: #{causal_self_attention.3} parent=0 // pred_check_branch
    %18 = sbr.rel (%p16) target = $region17
  $region16: #{causal_self_attention.3} parent=0 // pred_region
    %vm19 = vcmask 785408
    %20 = vst.msk [vmem:[#allocation2] sm:$0xff] %vm19, 0.0
    %21 = vst.msk [vmem:[#allocation2 + $0x8] sm:$0xff] %vm19, 0.0
  $region17: #{causal_self_attention.3} parent=0 // pred_fallthru
    _
  %v22 = vld [vmem:[#allocation2] sm:$0xff]
  %v23 = vld [vmem:[#allocation2 + $0x8] sm:$0xff]
  %v24 = vld [vmem:[%s0] sm:$0xff]
  %v25 = vld [vmem:[%s0 + $0x8] sm:$0xff]
  %v26 = vpack.c.bf16 %v25, %v24
  %v27 = vld [vmem:[%s1] sm:$0xff]
  %v28 = vld [vmem:[%s1 + $0x8] sm:$0xff]
  %v29 = vld [vmem:[%s1 + $0x10] sm:$0xff]
  %v30 = vld [vmem:[%s1 + $0x18] sm:$0xff]
  %v31 = vpack.c.bf16 %v28, %v27
  %v32 = vpack.c.bf16 %v30, %v29
  %vm33 = vcmask 261120
  %v35 = vsel %vm33, %v26, 0
  %37 = vmatprep.subr.bf16.mxu0 0
  %38 = vmatpush1.bf16.msra.mxu0 %v31
  %39 = vmatprep.subr.bf16.mxu0 0
  %40 = vmatpush1.bf16.msra.mxu0 %v32
  %41 = vmatprep.subr.bf16.mxu0 0
  %42 = vmatpush1.bf16.msra.mxu0 0
  %43 = vmatprep.subr.bf16.mxu0 0
  %44 = vmatpush1.bf16.msra.mxu0 0
  %45 = vmatprep.subr.bf16.mxu0 0
  %46 = vmatpush1.bf16.msra.mxu0 0
  %47 = vmatprep.subr.bf16.mxu0 0
  %48 = vmatpush1.bf16.msra.mxu0 0
  %49 = vmatprep.subr.bf16.mxu0 0
  %50 = vmatpush1.bf16.msra.mxu0 0
  %51 = vmatprep.subr.bf16.mxu0 0
  %52 = vmatpush1.bf16.msra.mxu0 0
  %53 = vmatprep.subr.bf16.mxu0 0
  %54 = vmatpush1.bf16.msra.mxu0 0
  %55 = vmatprep.subr.bf16.mxu0 0
  %56 = vmatpush1.bf16.msra.mxu0 0
  %57 = vmatprep.subr.bf16.mxu0 0
  %58 = vmatpush1.bf16.msra.mxu0 0
  %59 = vmatprep.subr.bf16.mxu0 0
  %60 = vmatpush1.bf16.msra.mxu0 0
  %61 = vmatprep.subr.bf16.mxu0 0
  %62 = vmatpush1.bf16.msra.mxu0 0
  %63 = vmatprep.subr.bf16.mxu0 0
  %64 = vmatpush1.bf16.msra.mxu0 0
  %65 = vmatprep.subr.bf16.mxu0 0
  %66 = vmatpush1.bf16.msra.mxu0 0
  %67 = vmatprep.subr.bf16.mxu0 0
  %68 = vmatpush1.bf16.msra.mxu0 0
  %69 = vmatprep.mubr.bf16.mxu0 0
  %70 = vmatmul.mubr.bf16.gmra.mrb[0].mxu0 %v35
  %v71 = vpop.f32.mrb[0].mxu0
  %v72 = vadd.f32 0.0, %v71
  %v73 = vpop.f32.mrb[0].mxu0
  %v74 = vpop.f32.mrb[0].mxu0
  %v75 = vadd.f32 0.0, %v74
  %v76 = vpop.f32.mrb[0].mxu0
  %77 = vdwg.mxu0
  %v78 = vadd.f32 %v22, %v72
  %v79 = vadd.f32 %v23, %v75
  %vm80 = vcmask 785408
  %81 = vst.msk [vmem:[#allocation2] sm:$0xff] %vm80, %v78
  %82 = vst.msk [vmem:[#allocation2 + $0x8] sm:$0xff] %vm80, %v79
  // Predicated region
  $region18: #{causal_self_attention.3} parent=0 // pred_check
    %p83 = pneg %p15
  $region19: #{causal_self_attention.3} parent=0 // pred_check_branch
    %85 = sbr.rel (%p83) target = $region21
  $region20: #{causal_self_attention.3} parent=0 // pred_region
    %v86 = vld [vmem:[#allocation2] sm:$0xff]
    %v87 = vld [vmem:[#allocation2 + $0x8] sm:$0xff]
    %v88 = vld [vmem:[%s2] sm:$0x1]
    %v90 = vlaneseq
    %v91 = vshrl.u32 %v90, 7
    %v92 = vsub.s32 0, %v91
    %v93 = vrot.slane %v88, %v92
    %v95 = vadd.f32 %v86, %v93
    %v96 = vadd.f32 %v87, %v93
    %97 = vst.msk [vmem:[%s3] sm:$0xff] %vm80, %v95
    %98 = vst.msk [vmem:[%s3 + $0x8] sm:$0xff] %vm80, %v96
  $region21: #{causal_self_attention.3} parent=0 // pred_fallthru
    _
  // Predicated region
  $region22: #{causal_self_attention.3} parent=0 // pred_check
    _
  $region23: #{causal_self_attention.3} parent=0 // pred_check_branch
    %100 = sbr.rel (0) target = $region25
  $region24: #{causal_self_attention.3} parent=0 // pred_region
    _
  $region25: #{causal_self_attention.3} parent=0 // pred_fallthru
    _
  // Predicated region
  $region26: #{causal_self_attention.3} parent=0 // pred_check
    _
  $region27: #{causal_self_attention.3} parent=0 // pred_check_branch
    %102 = sbr.rel (0) target = $region29
  $region28: #{causal_self_attention.3} parent=0 // pred_region
    _
  $region29: #{causal_self_attention.3} parent=0 // pred_fallthru
    _

// kernel: causal_self_attention.5
$region0: #{causal_self_attention.5}
  #allocation0 [shape = 'u32[]', space=smem, size = 0x4, offset = 0x4, fixed_abs, tag = 'smem constant byte address 0x4 - core index']
  #allocation1 [shape = 'u32[144,128]{1,0:T(1,128)}', space=vmem, size = 0x12000, scoped, tag = 'internal scratch']
  #allocation2 [shape = 'f32[16,32]{1,0:T(8,128)}', space=vmem, size = 0x2000, scoped, tag = 'scratch operand']
  %s0 = inlined_call_operand.vmem [shape: f32[16,32], index: 0, kind: input, shape index: {}]
  %s1 = inlined_call_operand.vmem [shape: f32[32,32], index: 1, kind: input, shape index: {}]
  %s2 = inlined_call_operand.vmem [shape: f32[1,32], index: 2, kind: input, shape index: {}]
  %s3 = inlined_call_operand.hbm [shape: f32[16,32], index: 3, kind: output, shape index: {}]
  %s4 = sld [smem:[#allocation0]]
  $region30: #{causal_self_attention.5} parent=0
    _
  %s6 = ssub.s32 1, %s4
  %s7 = scalar_select 0, %s6, %s4
  $region1: #{causal_self_attention.5} parent=0
    #allocation3 [shape = 'u8[8192]{0}', space=vmem, size = 0x2000, scoped, tag = 'output window, operand 0, single buffered']
    #allocation4 [shape = 's32[1]{0}', space=sflag, size = 0x4, scoped, tag = 'scoped memory for causal_self_attention.5']
    %8 = vsyncpa [#allocation4], 0
    // Predicated region
    $region2: #{causal_self_attention.5} parent=1 // pred_check
      _
    $region3: #{causal_self_attention.5} parent=1 // pred_check_branch
      %10 = sbr.rel (0) target = $region5
    $region4: #{causal_self_attention.5} parent=1 // pred_region
      _
    $region5: #{causal_self_attention.5} parent=1 // pred_fallthru
      _
    // Predicated region
    $region6: #{causal_self_attention.5} parent=1 // pred_check
      _
    $region7: #{causal_self_attention.5} parent=1 // pred_check_branch
      %12 = sbr.rel (0) target = $region9
    $region8: #{causal_self_attention.5} parent=1 // pred_region
      _
    $region9: #{causal_self_attention.5} parent=1 // pred_fallthru
      _
    // Predicated region
    $region10: #{causal_self_attention.5} parent=1 // pred_check
      _
    $region11: #{causal_self_attention.5} parent=1 // pred_check_branch
      %14 = sbr.rel (0) target = $region13
    $region12: #{causal_self_attention.5} parent=1 // pred_region
      _
    $region13: #{causal_self_attention.5} parent=1 // pred_fallthru
      _
    %p16 = scmp.eq.s32.totalorder 0, 0
    // Predicated region
    $region14: #{causal_self_attention.5} parent=1 // pred_check
      %p17 = pneg %p16
    $region15: #{causal_self_attention.5} parent=1 // pred_check_branch
      %19 = sbr.rel (%p17) target = $region17
    $region16: #{causal_self_attention.5} parent=1 // pred_region
      %vm20 = vcmask 261120
      %21 = vst.msk [vmem:[#allocation2] sm:$0xff] %vm20, 0.0
      %22 = vst.msk [vmem:[#allocation2 + $0x8] sm:$0xff] %vm20, 0.0
    $region17: #{causal_self_attention.5} parent=1 // pred_fallthru
      _
    %v23 = vld [vmem:[#allocation2] sm:$0xff]
    %v24 = vld [vmem:[#allocation2 + $0x8] sm:$0xff]
    %v25 = vld [vmem:[%s0] sm:$0xff]
    %v26 = vld [vmem:[%s0 + $0x8] sm:$0xff]
    %v27 = vpack.c.bf16 %v26, %v25
    %v28 = vld [vmem:[%s1] sm:$0xff]
    %v29 = vld [vmem:[%s1 + $0x8] sm:$0xff]
    %v30 = vld [vmem:[%s1 + $0x10] sm:$0xff]
    %v31 = vld [vmem:[%s1 + $0x18] sm:$0xff]
    %v32 = vpack.c.bf16 %v29, %v28
    %v33 = vpack.c.bf16 %v31, %v30
    %vm34 = vcmask 261120
    %v36 = vsel %vm34, %v27, 0
    %38 = vmatprep.subr.bf16.mxu0 0
    %39 = vmatpush1.bf16.msra.mxu0 %v32
    %40 = vmatprep.subr.bf16.mxu0 0
    %41 = vmatpush1.bf16.msra.mxu0 %v33
    %42 = vmatprep.subr.bf16.mxu0 0
    %43 = vmatpush1.bf16.msra.mxu0 0
    %44 = vmatprep.subr.bf16.mxu0 0
    %45 = vmatpush1.bf16.msra.mxu0 0
    %46 = vmatprep.subr.bf16.mxu0 0
    %47 = vmatpush1.bf16.msra.mxu0 0
    %48 = vmatprep.subr.bf16.mxu0 0
    %49 = vmatpush1.bf16.msra.mxu0 0
    %50 = vmatprep.subr.bf16.mxu0 0
    %51 = vmatpush1.bf16.msra.mxu0 0
    %52 = vmatprep.subr.bf16.mxu0 0
    %53 = vmatpush1.bf16.msra.mxu0 0
    %54 = vmatprep.subr.bf16.mxu0 0
    %55 = vmatpush1.bf16.msra.mxu0 0
    %56 = vmatprep.subr.bf16.mxu0 0
    %57 = vmatpush1.bf16.msra.mxu0 0
    %58 = vmatprep.subr.bf16.mxu0 0
    %59 = vmatpush1.bf16.msra.mxu0 0
    %60 = vmatprep.subr.bf16.mxu0 0
    %61 = vmatpush1.bf16.msra.mxu0 0
    %62 = vmatprep.subr.bf16.mxu0 0
    %63 = vmatpush1.bf16.msra.mxu0 0
    %64 = vmatprep.subr.bf16.mxu0 0
    %65 = vmatpush1.bf16.msra.mxu0 0
    %66 = vmatprep.subr.bf16.mxu0 0
    %67 = vmatpush1.bf16.msra.mxu0 0
    %68 = vmatprep.subr.bf16.mxu0 0
    %69 = vmatpush1.bf16.msra.mxu0 0
    %70 = vmatprep.mubr.bf16.mxu0 0
    %71 = vmatmul.mubr.bf16.gmra.mrb[0].mxu0 %v36
    %v72 = vpop.f32.mrb[0].mxu0
    %v73 = vadd.f32 0.0, %v72
    %v74 = vpop.f32.mrb[0].mxu0
    %v75 = vpop.f32.mrb[0].mxu0
    %v76 = vadd.f32 0.0, %v75
    %v77 = vpop.f32.mrb[0].mxu0
    %78 = vdwg.mxu0
    %v79 = vadd.f32 %v23, %v73
    %v80 = vadd.f32 %v24, %v76
    %81 = vst.msk [vmem:[#allocation2] sm:$0xff] %vm34, %v79
    %82 = vst.msk [vmem:[#allocation2 + $0x8] sm:$0xff] %vm34, %v80
    // Predicated region
    $region18: #{causal_self_attention.5} parent=1 // pred_check
      %p83 = pneg %p16
    $region19: #{causal_self_attention.5} parent=1 // pred_check_branch
      %85 = sbr.rel (%p83) target = $region21
    $region20: #{causal_self_attention.5} parent=1 // pred_region
      %v86 = vld [vmem:[#allocation2] sm:$0xff]
      %v87 = vld [vmem:[#allocation2 + $0x8] sm:$0xff]
      %v88 = vld [vmem:[%s2] sm:$0x1]
      %v90 = vlaneseq
      %v91 = vshrl.u32 %v90, 7
      %v92 = vsub.s32 0, %v91
      %v93 = vrot.slane %v88, %v92
      %v95 = vadd.f32 %v86, %v93
      %v96 = vadd.f32 %v87, %v93
      %97 = vst.msk [vmem:[#allocation3] sm:$0xff] %vm34, %v95
      %98 = vst.msk [vmem:[#allocation3 + $0x8] sm:$0xff] %vm34, %v96
    $region21: #{causal_self_attention.5} parent=1 // pred_fallthru
      _
    // Predicated region
    $region22: #{causal_self_attention.5} parent=1 // pred_check
      _
    $region23: #{causal_self_attention.5} parent=1 // pred_check_branch
      %100 = sbr.rel (0) target = $region25
    $region24: #{causal_self_attention.5} parent=1 // pred_region
      %s102 = ssub.s32 256, 256
      %103 = vsyncadd [#allocation4], %s102
      %s104 = sshll.u32 [#allocation3], 4
      %s105 = int_to_ptr.vmem [resolvable:$true] %s104
      %110 = dma.vmem_to_hbm [thread:$0]  %s105, 256, %s3, [#allocation4], 128, 128, 8
    $region25: #{causal_self_attention.5} parent=1 // pred_fallthru
      _
    // Predicated region
    $region26: #{causal_self_attention.5} parent=1 // pred_check
      _
    $region27: #{causal_self_attention.5} parent=1 // pred_check_branch
      %112 = sbr.rel (0) target = $region29
    $region28: #{causal_self_attention.5} parent=1 // pred_region
      %113 = dma.done [#allocation4], 256
    $region29: #{causal_self_attention.5} parent=1 // pred_fallthru
      _
    %114 = vsyncpa [#allocation4], 1

// kernel: causal_self_attention.4
$region0: #{causal_self_attention.4}
  #allocation0 [shape = 'u32[]', space=smem, size = 0x4, offset = 0x4, fixed_abs, tag = 'smem constant byte address 0x4 - core index']
  #allocation1 [shape = 'u32[144,128]{1,0:T(1,128)}', space=vmem, size = 0x12000, scoped, tag = 'internal scratch']
  #allocation2 [shape = 'f32[8,1]{1,0:T(8,128)}', space=vmem, size = 0x1000, scoped, tag = 'scratch operand']
  #allocation3 [shape = 'f32[8,1]{1,0:T(8,128)}', space=vmem, size = 0x1000, scoped, tag = 'scratch operand']
  #allocation4 [shape = 'f32[8,8]{1,0:T(8,128)}', space=vmem, size = 0x1000, scoped, tag = 'scratch operand']
  %s0 = inlined_call_operand.vmem [shape: f32[2,4,8,8], index: 0, kind: input, shape index: {}]
  %s1 = inlined_call_operand.vmem [shape: f32[2,4,8,8], index: 1, kind: input, shape index: {}]
  %s2 = inlined_call_operand.vmem [shape: f32[2,4,8,8], index: 2, kind: input, shape index: {}]
  %s3 = inlined_call_operand.vmem [shape: f32[2,4,8,8], index: 3, kind: output, shape index: {}]
  %s4 = sld [smem:[#allocation0]]
  $region57: #{causal_self_attention.4} parent=0
    _
  %s6 = ssub.s32 1, %s4
  %s7 = scalar_select 0, %s6, %s4
  loop: start=0, step=1, limit=10
  $region2: #{causal_self_attention.4} parent=0 // loop_pre_header
    _
  $region3: #{causal_self_attention.4} parent=0 // loop_header
    %s9 = sphi 0, %s13
    %p10 = scmp.ge.s32.totalorder %s9, 10
    %s16 = sphi 0, %s42
    %s17 = sphi 0, %s38
    %s18 = sphi 0, %s34
    %s19 = sphi 0, %s30
    %s20 = sphi 0, %s16
    %s21 = sphi 0, %s17
    %s22 = sphi 0, %s18
    %s23 = sphi 0, %s19
    %s24 = sphi 0, %s20
    %s25 = sphi 0, %s21
    %s26 = sphi 0, %s22
    %s27 = sphi 0, %s23
    %s49 = sphi 0, %s51
    %s52 = sphi 0, %s49
    %s53 = sphi 0, %s52
    %s69 = sphi 0, %s53
    %s79 = sphi 0, %s81
    %s82 = sphi 0, %s79
    %s83 = sphi 0, %s82
    %s99 = sphi 0, %s83
    %s109 = sphi 0, %s111
    %s112 = sphi 0, %s109
    %s113 = sphi 0, %s112
    %s129 = sphi 0, %s113
    %s139 = sphi 0, %s141
    %s142 = sphi 0, %s139
    %s143 = sphi 0, %s142
    %s159 = sphi 0, %s143
  $region4: #{causal_self_attention.4} parent=0 // loop_header_branch
    %12 = sbr.rel (%p10) target = $region8
  $region5: #{causal_self_attention.4} parent=0 // loop_body
    %s14 = ssub.s32 %s9, 1
    %s15 = ssub.s32 %s9, 2
    %s28 = sadd.s32 1, %s19
    %p29 = scmp.ge.s32.totalorder %s28, 1
    %s30 = scalar_select %p29, 0, %s28
    %s31 = sadd.s32 1, %s18
    %s32 = scalar_select %p29, %s31, %s18
    %p33 = scmp.ge.s32.totalorder %s32, 1
    %s34 = scalar_select %p33, 0, %s32
    %s35 = sadd.s32 1, %s17
    %s36 = scalar_select %p33, %s35, %s17
    %p37 = scmp.ge.s32.totalorder %s36, 4
    %s38 = scalar_select %p37, 0, %s36
    %s39 = sadd.s32 1, %s16
    %s40 = scalar_select %p37, %s39, %s16
    %p41 = scmp.ge.s32.totalorder %s40, 2
    %s42 = scalar_select %p41, 0, %s40
    %s43 = ssub.s32 %s16, %s42
    %s44 = ssub.s32 %s17, %s38
    %s45 = sor.u32 %s43, %s44
    %s46 = ssub.s32 %s18, %s34
    %s47 = sor.u32 %s45, %s46
    %p48 = scmp.eq.s32.totalorder %s47, 0
    %s50 = sadd.s32 %s49, 1
    %s51 = scalar_select %p48, %s49, %s50
    %p54 = pneg %p48
    %p55 = scmp.eq.s32.totalorder %s9, 7
    %p56 = por %p54, %p55
    %p57 = scmp.ne.s32.totalorder %s49, %s52
    %p58 = scmp.eq.s32.totalorder %s9, 0
    %p59 = por %p57, %p58
    %p60 = scmp.ne.s32.totalorder %s49, %s52
    %p61 = scmp.eq.s32.totalorder %s14, 7
    %p62 = por %p60, %p61
    %p63 = scmp.ne.s32.totalorder %s52, %s53
    %p64 = scmp.eq.s32.totalorder %s14, 0
    %p65 = por %p63, %p64
    %p66 = scmp.ne.s32.totalorder %s52, %s53
    %p67 = scmp.eq.s32.totalorder %s15, 7
    %p68 = por %p66, %p67
    %p70 = scmp.ne.s32.totalorder %s53, %s69
    %p71 = scmp.eq.s32.totalorder %s15, 0
    %p72 = por %p70, %p71
    %s73 = ssub.s32 %s16, %s42
    %s74 = ssub.s32 %s17, %s38
    %s75 = sor.u32 %s73, %s74
    %s76 = ssub.s32 %s19, %s30
    %s77 = sor.u32 %s75, %s76
    %p78 = scmp.eq.s32.totalorder %s77, 0
    %s80 = sadd.s32 %s79, 1
    %s81 = scalar_select %p78, %s79, %s80
    %p84 = pneg %p78
    %p85 = scmp.eq.s32.totalorder %s9, 7
    %p86 = por %p84, %p85
    %p87 = scmp.ne.s32.totalorder %s79, %s82
    %p88 = scmp.eq.s32.totalorder %s9, 0
    %p89 = por %p87, %p88
    %p90 = scmp.ne.s32.totalorder %s79, %s82
    %p91 = scmp.eq.s32.totalorder %s14, 7
    %p92 = por %p90, %p91
    %p93 = scmp.ne.s32.totalorder %s82, %s83
    %p94 = scmp.eq.s32.totalorder %s14, 0
    %p95 = por %p93, %p94
    %p96 = scmp.ne.s32.totalorder %s82, %s83
    %p97 = scmp.eq.s32.totalorder %s15, 7
    %p98 = por %p96, %p97
    %p100 = scmp.ne.s32.totalorder %s83, %s99
    %p101 = scmp.eq.s32.totalorder %s15, 0
    %p102 = por %p100, %p101
    %s103 = ssub.s32 %s16, %s42
    %s104 = ssub.s32 %s17, %s38
    %s105 = sor.u32 %s103, %s104
    %s106 = ssub.s32 %s19, %s30
    %s107 = sor.u32 %s105, %s106
    %p108 = scmp.eq.s32.totalorder %s107, 0
    %s110 = sadd.s32 %s109, 1
    %s111 = scalar_select %p108, %s109, %s110
    %p114 = pneg %p108
    %p115 = scmp.eq.s32.totalorder %s9, 7
    %p116 = por %p114, %p115
    %p117 = scmp.ne.s32.totalorder %s109, %s112
    %p118 = scmp.eq.s32.totalorder %s9, 0
    %p119 = por %p117, %p118
    %p120 = scmp.ne.s32.totalorder %s109, %s112
    %p121 = scmp.eq.s32.totalorder %s14, 7
    %p122 = por %p120, %p121
    %p123 = scmp.ne.s32.totalorder %s112, %s113
    %p124 = scmp.eq.s32.totalorder %s14, 0
    %p125 = por %p123, %p124
    %p126 = scmp.ne.s32.totalorder %s112, %s113
    %p127 = scmp.eq.s32.totalorder %s15, 7
    %p128 = por %p126, %p127
    %p130 = scmp.ne.s32.totalorder %s113, %s129
    %p131 = scmp.eq.s32.totalorder %s15, 0
    %p132 = por %p130, %p131
    %s133 = ssub.s32 %s16, %s42
    %s134 = ssub.s32 %s17, %s38
    %s135 = sor.u32 %s133, %s134
    %s136 = ssub.s32 %s18, %s34
    %s137 = sor.u32 %s135, %s136
    %p138 = scmp.eq.s32.totalorder %s137, 0
    %s140 = sadd.s32 %s139, 1
    %s141 = scalar_select %p138, %s139, %s140
    %p144 = pneg %p138
    %p145 = scmp.eq.s32.totalorder %s9, 7
    %p146 = por %p144, %p145
    %p147 = scmp.ne.s32.totalorder %s139, %s142
    %p148 = scmp.eq.s32.totalorder %s9, 0
    %p149 = por %p147, %p148
    %p150 = scmp.ne.s32.totalorder %s139, %s142
    %p151 = scmp.eq.s32.totalorder %s14, 7
    %p152 = por %p150, %p151
    %p153 = scmp.ne.s32.totalorder %s142, %s143
    %p154 = scmp.eq.s32.totalorder %s14, 0
    %p155 = por %p153, %p154
    %p156 = scmp.ne.s32.totalorder %s142, %s143
    %p157 = scmp.eq.s32.totalorder %s15, 7
    %p158 = por %p156, %p157
    %p160 = scmp.ne.s32.totalorder %s143, %s159
    %p161 = scmp.eq.s32.totalorder %s15, 0
    %p162 = por %p160, %p161
    %p163 = scmp.le.s32.totalorder 1, %s9
    %p164 = scmp.lt.s32.totalorder %s9, 9
    %p165 = pnand %p163, %p164
    %p166 = pneg %p165
    // Predicated region
    $region9: #{causal_self_attention.4} parent=5 // pred_check
      _
    $region10: #{causal_self_attention.4} parent=5 // pred_check_branch
      %168 = sbr.rel (%p165) target = $region12
    $region11: #{causal_self_attention.4} parent=5 // pred_region
      %s169 = ssub.s32 %s9, 1
    $region12: #{causal_self_attention.4} parent=5 // pred_fallthru
      _
    %p170 = scmp.lt.s32.totalorder %s9, 8
    // Predicated region
    $region13: #{causal_self_attention.4} parent=5 // pred_check
      %p171 = pneg %p170
    $region14: #{causal_self_attention.4} parent=5 // pred_check_branch
      %173 = sbr.rel (%p171) target = $region16
    $region15: #{causal_self_attention.4} parent=5 // pred_region
      // Predicated region
      $region17: #{causal_self_attention.4} parent=15 // pred_check
        %p174 = pneg %p59
      $region18: #{causal_self_attention.4} parent=15 // pred_check_branch
        %176 = sbr.rel (%p174) target = $region20
      $region19: #{causal_self_attention.4} parent=15 // pred_region
        %p177 = scmp.lt.s32.totalorder %s16, 1
        %s178 = scalar_select %p177, %s16, 1
        %p179 = scmp.lt.s32.totalorder %s17, 3
        %s180 = scalar_select %p179, %s17, 3
        %p181 = scmp.lt.s32.totalorder %s18, 0
        %s182 = scalar_select %p181, %s18, 0
        %s183 = sadd.s32 %s182, %s180
        %s184 = smul.addr %s178, 4
        %s185 = sadd.s32 %s183, %s184
        %s186 = smul.addr %s185, 8
        %s187 = scalar_lea.vmem %s0, %s186
      $region20: #{causal_self_attention.4} parent=15 // pred_fallthru
        _
      // Predicated region
      $region21: #{causal_self_attention.4} parent=15 // pred_check
        %p188 = pneg %p89
      $region22: #{causal_self_attention.4} parent=15 // pred_check_branch
        %190 = sbr.rel (%p188) target = $region24
      $region23: #{causal_self_attention.4} parent=15 // pred_region
        %p191 = scmp.lt.s32.totalorder %s16, 1
        %s192 = scalar_select %p191, %s16, 1
        %p193 = scmp.lt.s32.totalorder %s17, 3
        %s194 = scalar_select %p193, %s17, 3
        %p195 = scmp.lt.s32.totalorder %s19, 0
        %s196 = scalar_select %p195, %s19, 0
        %s197 = sadd.s32 %s196, %s194
        %s198 = smul.addr %s192, 4
        %s199 = sadd.s32 %s197, %s198
        %s200 = smul.addr %s199, 8
        %s201 = scalar_lea.vmem %s1, %s200
      $region24: #{causal_self_attention.4} parent=15 // pred_fallthru
        _
      // Predicated region
      $region25: #{causal_self_attention.4} parent=15 // pred_check
        %p202 = pneg %p119
      $region26: #{causal_self_attention.4} parent=15 // pred_check_branch
        %204 = sbr.rel (%p202) target = $region28
      $region27: #{causal_self_attention.4} parent=15 // pred_region
        %p205 = scmp.lt.s32.totalorder %s16, 1
        %s206 = scalar_select %p205, %s16, 1
        %p207 = scmp.lt.s32.totalorder %s17, 3
        %s208 = scalar_select %p207, %s17, 3
        %p209 = scmp.lt.s32.totalorder %s19, 0
        %s210 = scalar_select %p209, %s19, 0
        %s211 = sadd.s32 %s210, %s208
        %s212 = smul.addr %s206, 4
        %s213 = sadd.s32 %s211, %s212
        %s214 = smul.addr %s213, 8
        %s215 = scalar_lea.vmem %s2, %s214
      $region28: #{causal_self_attention.4} parent=15 // pred_fallthru
        _
    $region16: #{causal_self_attention.4} parent=5 // pred_fallthru
      _
    %p216 = scmp.le.s32.totalorder 1, %s9
    %p217 = scmp.lt.s32.totalorder %s9, 9
    %p218 = pnand %p216, %p217
    %p219 = pneg %p218
    // Predicated region
    $region29: #{causal_self_attention.4} parent=5 // pred_check
      _
    $region30: #{causal_self_attention.4} parent=5 // pred_check_branch
      %221 = sbr.rel (%p218) target = $region32
    $region31: #{causal_self_attention.4} parent=5 // pred_region
      %s222 = ssub.s32 %s9, 1
      %p223 = scmp.lt.s32.totalorder %s20, 1
      %s224 = scalar_select %p223, %s20, 1
      %p225 = scmp.lt.s32.totalorder %s21, 3
      %s226 = scalar_select %p225, %s21, 3
      %p227 = scmp.lt.s32.totalorder %s22, 0
      %s228 = scalar_select %p227, %s22, 0
      %s229 = sadd.s32 %s228, %s226
      %s230 = smul.addr %s224, 4
      %s231 = sadd.s32 %s229, %s230
      %s232 = smul.addr %s231, 8
      %s233 = scalar_lea.vmem %s0, %s232
      %p234 = pneg %p65
      %p235 = pneg %p62
      %p236 = scmp.lt.s32.totalorder %s20, 1
      %s237 = scalar_select %p236, %s20, 1
      %p238 = scmp.lt.s32.totalorder %s21, 3
      %s239 = scalar_select %p238, %s21, 3
      %p240 = scmp.lt.s32.totalorder %s23, 0
      %s241 = scalar_select %p240, %s23, 0
      %s242 = sadd.s32 %s241, %s239
      %s243 = smul.addr %s237, 4
      %s244 = sadd.s32 %s242, %s243
      %s245 = smul.addr %s244, 8
      %s246 = scalar_lea.vmem %s1, %s245
      %p247 = pneg %p95
      %p248 = pneg %p92
      %p249 = scmp.lt.s32.totalorder %s20, 1
      %s250 = scalar_select %p249, %s20, 1
      %p251 = scmp.lt.s32.totalorder %s21, 3
      %s252 = scalar_select %p251, %s21, 3
      %p253 = scmp.lt.s32.totalorder %s23, 0
      %s254 = scalar_select %p253, %s23, 0
      %s255 = sadd.s32 %s254, %s252
      %s256 = smul.addr %s250, 4
      %s257 = sadd.s32 %s255, %s256
      %s258 = smul.addr %s257, 8
      %s259 = scalar_lea.vmem %s2, %s258
      %p260 = pneg %p125
      %p261 = pneg %p122
      %p262 = pneg %p155
      %p263 = pneg %p152
      %p264 = scmp.lt.s32.totalorder %s20, 1
      %s265 = scalar_select %p264, %s20, 1
      %p266 = scmp.lt.s32.totalorder %s21, 3
      %s267 = scalar_select %p266, %s21, 3
      %p268 = scmp.lt.s32.totalorder %s22, 0
      %s269 = scalar_select %p268, %s22, 0
      %s270 = sadd.s32 %s269, %s267
      %s271 = smul.addr %s265, 4
      %s272 = sadd.s32 %s270, %s271
      %s273 = smul.addr %s272, 8
      %s274 = scalar_lea.vmem %s3, %s273
      %p275 = scmp.lt.s32.totalorder %s20, 1
      %s276 = scalar_select %p275, %s20, 1
      %p277 = scmp.lt.s32.totalorder %s21, 3
      %s278 = scalar_select %p277, %s21, 3
      %p279 = scmp.lt.s32.totalorder %s22, 0
      %s280 = scalar_select %p279, %s22, 0
      %s281 = sadd.s32 %s280, %s278
      %s282 = smul.addr %s276, 4
      %s283 = sadd.s32 %s281, %s282
      %s284 = smul.addr %s283, 8
      %s285 = scalar_lea.vmem %s0, %s284
      %p286 = scmp.lt.s32.totalorder %s20, 1
      %s287 = scalar_select %p286, %s20, 1
      %p288 = scmp.lt.s32.totalorder %s21, 3
      %s289 = scalar_select %p288, %s21, 3
      %p290 = scmp.lt.s32.totalorder %s23, 0
      %s291 = scalar_select %p290, %s23, 0
      %s292 = sadd.s32 %s291, %s289
      %s293 = smul.addr %s287, 4
      %s294 = sadd.s32 %s292, %s293
      %s295 = smul.addr %s294, 8
      %s296 = scalar_lea.vmem %s1, %s295
      %p297 = scmp.lt.s32.totalorder %s20, 1
      %s298 = scalar_select %p297, %s20, 1
      %p299 = scmp.lt.s32.totalorder %s21, 3
      %s300 = scalar_select %p299, %s21, 3
      %p301 = scmp.lt.s32.totalorder %s23, 0
      %s302 = scalar_select %p301, %s23, 0
      %s303 = sadd.s32 %s302, %s300
      %s304 = smul.addr %s298, 4
      %s305 = sadd.s32 %s303, %s304
      %s306 = smul.addr %s305, 8
      %s307 = scalar_lea.vmem %s2, %s306
      %p308 = scmp.lt.s32.totalorder %s20, 1
      %s309 = scalar_select %p308, %s20, 1
      %p310 = scmp.lt.s32.totalorder %s21, 3
      %s311 = scalar_select %p310, %s21, 3
      %p312 = scmp.lt.s32.totalorder %s22, 0
      %s313 = scalar_select %p312, %s22, 0
      %s314 = sadd.s32 %s313, %s311
      %s315 = smul.addr %s309, 4
      %s316 = sadd.s32 %s314, %s315
      %s317 = smul.addr %s316, 8
      %s318 = scalar_lea.vmem %s3, %s317
      %p320 = scmp.eq.s32.totalorder %s23, 0
      // Predicated region
      $region33: #{causal_self_attention.4} parent=31 // pred_check
        %p321 = pneg %p320
      $region34: #{causal_self_attention.4} parent=31 // pred_check_branch
        %323 = sbr.rel (%p321) target = $region36
      $region35: #{causal_self_attention.4} parent=31 // pred_region
        %vm324 = vcmask 7168
        %325 = vst.msk [vmem:[#allocation2] sm:$0xff] %vm324, -inf
        %326 = vst.msk [vmem:[#allocation3] sm:$0xff] %vm324, 0.0
        %vm327 = vcmask 64512
        %328 = vst.msk [vmem:[#allocation4] sm:$0xff] %vm327, 0.0
      $region36: #{causal_self_attention.4} parent=31 // pred_fallthru
        _
      %s329 = smul.u32 %s23, 8
      %s330 = smul.u32 %s22, 8
      %s331 = sadd.s32 %s330, 7
      %p332 = scmp.le.s32.totalorder %s329, %s331
      // Predicated region
      $region37: #{causal_self_attention.4} parent=31 // pred_check
        %p333 = pneg %p332
      $region38: #{causal_self_attention.4} parent=31 // pred_check_branch
        %335 = sbr.rel (%p333) target = $region40
      $region39: #{causal_self_attention.4} parent=31 // pred_region
        %v336 = vld [vmem:[%s285] sm:$0xff]
        %v337 = vmul.f32 %v336, 0.35355338
        %v338 = vpack.c.bf16 %v337, %v337
        %v339 = vld [vmem:[%s296] sm:$0xff]
        %v340 = vpack.c.bf16 %v339, %v339
        %vm341 = vcmask 64512
        %v343 = vsel %vm341, %v338, 0
        %v346 = vsel %vm341, %v340, 0
        %348 = vmatprep.subr.bf16.mxu0 0
        %349 = vmatpush1.bf16.xpose.msra.mxu0 %v346
        %350 = vmatprep.subr.bf16.mxu0 0
        %351 = vmatpush1.bf16.xpose.msra.mxu0 0
        %352 = vmatprep.subr.bf16.mxu0 0
        %353 = vmatpush1.bf16.xpose.msra.mxu0 0
        %354 = vmatprep.subr.bf16.mxu0 0
        %355 = vmatpush1.bf16.xpose.msra.mxu0 0
        %356 = vmatprep.subr.bf16.mxu0 0
        %357 = vmatpush1.bf16.xpose.msra.mxu0 0
        %358 = vmatprep.subr.bf16.mxu0 0
        %359 = vmatpush1.bf16.xpose.msra.mxu0 0
        %360 = vmatprep.subr.bf16.mxu0 0
        %361 = vmatpush1.bf16.xpose.msra.mxu0 0
        %362 = vmatprep.subr.bf16.mxu0 0
        %363 = vmatpush1.bf16.xpose.msra.mxu0 0
        %364 = vmatprep.subr.bf16.mxu0 0
        %365 = vmatpush1.bf16.xpose.msra.mxu0 0
        %366 = vmatprep.subr.bf16.mxu0 0
        %367 = vmatpush1.bf16.xpose.msra.mxu0 0
        %368 = vmatprep.subr.bf16.mxu0 0
        %369 = vmatpush1.bf16.xpose.msra.mxu0 0
        %370 = vmatprep.subr.bf16.mxu0 0
        %371 = vmatpush1.bf16.xpose.msra.mxu0 0
        %372 = vmatprep.subr.bf16.mxu0 0
        %373 = vmatpush1.bf16.xpose.msra.mxu0 0
        %374 = vmatprep.subr.bf16.mxu0 0
        %375 = vmatpush1.bf16.xpose.msra.mxu0 0
        %376 = vmatprep.subr.bf16.mxu0 0
        %377 = vmatpush1.bf16.xpose.msra.mxu0 0
        %378 = vmatprep.subr.bf16.mxu0 0
        %379 = vmatpush1.bf16.xpose.msra.mxu0 0
        %380 = vmatprep.mubr.bf16.mxu0 0
        %381 = vmatmul.mubr.bf16.gmra.mrb[0].mxu0 %v343
        %v382 = vpop.f32.mrb[0].mxu0
        %v383 = vadd.f32 0.0, %v382
        %v384 = vpop.f32.mrb[0].mxu0
        %v385 = vpop.f32.mrb[0].mxu0
        %v386 = vpop.f32.mrb[0].mxu0
        %387 = vdwg.mxu0
        %v388 = vlaneseq
        %v389 = vshrl.u32 %v388, 7
        %v390 = vstv %s330
        %v391 = vadd.s32 %v389, %v390
        %v392 = vlaneseq
        %v393 = vand.u32 %v392, 127
        %v394 = vstv %s329
        %v395 = vadd.s32 %v393, %v394
        %vm396 = vcmp.le.s32.totalorder %v395, %v391
        %v397 = vsel %vm396, %v383, -inf
        %v398 = vld [vmem:[#allocation2] sm:$0xff]
        %v399 = vsel %vm341, %v397, -inf
        %400 = vmax.xlane.f32.xlu0 %v399
        %v401 = vpop.xlane.xlu0 %400
        %v402 = vmax.f32 %v398, %v401
        %v403 = vsub.f32 %v398, %v402
        %v404 = vmul.f32 %v403, 1.442695
        %v405 = vpow.pop %v404
        %407 = vset.pattern.permute.xlu0 0
        %408 = vperm.xlu0 %407, %v402
        %v409 = vpop.permute.xlu0 %408
        %v411 = vsub.f32 %v397, %v409
        %v412 = vmul.f32 %v411, 1.442695
        %v413 = vpow.pop %v412
        %v414 = vld [vmem:[#allocation3] sm:$0xff]
        %v415 = vmul.f32 %v405, %v414
        %v416 = vsel %vm341, %v413, 0.0
        %417 = vadd.xlane.f32.xlu0 %v416
        %v418 = vpop.xlane.xlu0 %417
        %v419 = vadd.f32 %v415, %v418
        %vm420 = vcmask 7168
        %421 = vst.msk [vmem:[#allocation3] sm:$0xff] %vm420, %v419
        %v422 = vld [vmem:[#allocation4] sm:$0xff]
        %424 = vset.pattern.permute.xlu0 0
        %425 = vperm.xlu0 %424, %v405
        %v426 = vpop.permute.xlu0 %425
        %v428 = vmul.f32 %v426, %v422
        %v429 = vpack.c.bf16 %v413, %v413
        %v430 = vld [vmem:[%s307] sm:$0xff]
        %v431 = vpack.c.bf16 %v430, %v430
        %v433 = vsel %vm341, %v429, 0
        %vm435 = vcmask 1043456
        %v437 = vsel %vm435, %v431, 0
        %439 = vmatprep.subr.bf16.mxu0 0
        %440 = vmatpush1.bf16.msra.mxu0 %v437
        %441 = vmatprep.subr.bf16.mxu0 0
        %442 = vmatpush1.bf16.msra.mxu0 0
        %443 = vmatprep.subr.bf16.mxu0 0
        %444 = vmatpush1.bf16.msra.mxu0 0
        %445 = vmatprep.subr.bf16.mxu0 0
        %446 = vmatpush1.bf16.msra.mxu0 0
        %447 = vmatprep.subr.bf16.mxu0 0
        %448 = vmatpush1.bf16.msra.mxu0 0
        %449 = vmatprep.subr.bf16.mxu0 0
        %450 = vmatpush1.bf16.msra.mxu0 0
        %451 = vmatprep.subr.bf16.mxu0 0
        %452 = vmatpush1.bf16.msra.mxu0 0
        %453 = vmatprep.subr.bf16.mxu0 0
        %454 = vmatpush1.bf16.msra.mxu0 0
        %455 = vmatprep.subr.bf16.mxu0 0
        %456 = vmatpush1.bf16.msra.mxu0 0
        %457 = vmatprep.subr.bf16.mxu0 0
        %458 = vmatpush1.bf16.msra.mxu0 0
        %459 = vmatprep.subr.bf16.mxu0 0
        %460 = vmatpush1.bf16.msra.mxu0 0
        %461 = vmatprep.subr.bf16.mxu0 0
        %462 = vmatpush1.bf16.msra.mxu0 0
        %463 = vmatprep.subr.bf16.mxu0 0
        %464 = vmatpush1.bf16.msra.mxu0 0
        %465 = vmatprep.subr.bf16.mxu0 0
        %466 = vmatpush1.bf16.msra.mxu0 0
        %467 = vmatprep.subr.bf16.mxu0 0
        %468 = vmatpush1.bf16.msra.mxu0 0
        %469 = vmatprep.subr.bf16.mxu0 0
        %470 = vmatpush1.bf16.msra.mxu0 0
        %471 = vmatprep.mubr.bf16.mxu0 0
        %472 = vmatmul.mubr.bf16.gmra.mrb[0].mxu0 %v433
        %v473 = vpop.f32.mrb[0].mxu0
        %v474 = vadd.f32 0.0, %v473
        %v475 = vpop.f32.mrb[0].mxu0
        %v476 = vpop.f32.mrb[0].mxu0
        %v477 = vpop.f32.mrb[0].mxu0
        %478 = vdwg.mxu0
        %v479 = vadd.f32 %v428, %v474
        %480 = vst.msk [vmem:[#allocation4] sm:$0xff] %vm341, %v479
        %481 = vst.msk [vmem:[#allocation2] sm:$0xff] %vm420, %v402
      $region40: #{causal_self_attention.4} parent=31 // pred_fallthru
        _
      // Predicated region
      $region41: #{causal_self_attention.4} parent=31 // pred_check
        %p482 = pneg %p320
      $region42: #{causal_self_attention.4} parent=31 // pred_check_branch
        %484 = sbr.rel (%p482) target = $region44
      $region43: #{causal_self_attention.4} parent=31 // pred_region
        %v485 = vld [vmem:[#allocation3] sm:$0xff]
        %v486 = vrcp.pop %v485
        %v487 = vld [vmem:[#allocation4] sm:$0xff]
        %489 = vset.pattern.permute.xlu0 0
        %490 = vperm.xlu0 %489, %v486
        %v491 = vpop.permute.xlu0 %490
        %v493 = vmul.f32 %v487, %v491
        %vm494 = vcmask 64512
        %495 = vst.msk [vmem:[%s318] sm:$0xff] %vm494, %v493
      $region44: #{causal_self_attention.4} parent=31 // pred_fallthru
        _
      %p496 = scmp.lt.s32.totalorder %s20, 1
      %s497 = scalar_select %p496, %s20, 1
      %p498 = scmp.lt.s32.totalorder %s21, 3
      %s499 = scalar_select %p498, %s21, 3
      %p500 = scmp.lt.s32.totalorder %s22, 0
      %s501 = scalar_select %p500, %s22, 0
      %s502 = sadd.s32 %s501, %s499
      %s503 = smul.addr %s497, 4
      %s504 = sadd.s32 %s502, %s503
      %s505 = smul.addr %s504, 8
      %s506 = scalar_lea.vmem %s3, %s505
      // Predicated region
      $region45: #{causal_self_attention.4} parent=31 // pred_check
        %p507 = pneg %p152
      $region46: #{causal_self_attention.4} parent=31 // pred_check_branch
        %509 = sbr.rel (%p507) target = $region48
      $region47: #{causal_self_attention.4} parent=31 // pred_region
        _
      $region48: #{causal_self_attention.4} parent=31 // pred_fallthru
        _
    $region32: #{causal_self_attention.4} parent=5 // pred_fallthru
      _
    %p510 = scmp.le.s32.totalorder 2, %s9
    // Predicated region
    $region49: #{causal_self_attention.4} parent=5 // pred_check
      %p511 = pneg %p510
    $region50: #{causal_self_attention.4} parent=5 // pred_check_branch
      %513 = sbr.rel (%p511) target = $region52
    $region51: #{causal_self_attention.4} parent=5 // pred_region
      %s514 = ssub.s32 %s9, 2
      // Predicated region
      $region53: #{causal_self_attention.4} parent=51 // pred_check
        %p515 = pneg %p158
      $region54: #{causal_self_attention.4} parent=51 // pred_check_branch
        %517 = sbr.rel (%p515) target = $region56
      $region55: #{causal_self_attention.4} parent=51 // pred_region
        %p518 = scmp.lt.s32.totalorder %s24, 1
        %s519 = scalar_select %p518, %s24, 1
        %p520 = scmp.lt.s32.totalorder %s25, 3
        %s521 = scalar_select %p520, %s25, 3
        %p522 = scmp.lt.s32.totalorder %s26, 0
        %s523 = scalar_select %p522, %s26, 0
        %s524 = sadd.s32 %s523, %s521
        %s525 = smul.addr %s519, 4
        %s526 = sadd.s32 %s524, %s525
        %s527 = smul.addr %s526, 8
        %s528 = scalar_lea.vmem %s3, %s527
      $region56: #{causal_self_attention.4} parent=51 // pred_fallthru
        _
    $region52: #{causal_self_attention.4} parent=5 // pred_fallthru
      _
  $region6: #{causal_self_attention.4} parent=0 // loop_footer
    %s13 = sadd.s32 1, %s9
  $region7: #{causal_self_attention.4} parent=0 // loop_footer_branch
    %8 = sbr.rel target = $region3
  $region8: #{causal_self_attention.4} parent=0 // loop_exit
    _

</llo_original>
